<compile_context>
chip_gen: v5e
topology: v5e:2x2
jax: 0.10.0
libtpu: 0.0.40
codegen_flags: <defaults>
</compile_context>

<pallas_src>
import jax
import jax.numpy as jnp
from jax import lax
from jax.experimental import pallas as pl
from jax.experimental.pallas import tpu as pltpu


# ----------------------------------------------------------------------------
# Kernels
# ----------------------------------------------------------------------------
def _resident_kernel(x_ref, w_ref, b_ref, o_ref):
    # x: (tm, Dc) bf16, w: (Vp, Dc) bf16 (resident), b: (1, Vp) f32, o: (tm, Vp)
    logits = lax.dot_general(
        x_ref[...], w_ref[...],
        dimension_numbers=(((1,), (1,)), ((), ())),
        preferred_element_type=jnp.float32,
    ) + b_ref[...]
    m = jnp.max(logits, axis=-1, keepdims=True)          # XLU reduction
    shifted = logits - m
    lse = jnp.log(jnp.sum(jnp.exp(shifted), axis=-1, keepdims=True))  # EUP + XLU
    o_ref[...] = (shifted - lse).astype(o_ref.dtype)


def _vocab_tiled_kernel(x_ref, w_ref, b_ref, o_ref, m_sc, l_sc):
    # grid = (row tiles, phase in {0,1}, vocab tiles)
    # x: (tm, Dc) bf16, w: (tv, Dc) bf16, b: (1, tv) f32, o: (tm, tv)
    p = pl.program_id(1)
    k = pl.program_id(2)

    s = lax.dot_general(
        x_ref[...], w_ref[...],
        dimension_numbers=(((1,), (1,)), ((), ())),
        preferred_element_type=jnp.float32,
    ) + b_ref[...]

    @pl.when(jnp.logical_and(p == 0, k == 0))
    def _():
        m_sc[...] = jnp.full_like(m_sc, -jnp.inf)
        l_sc[...] = jnp.zeros_like(l_sc)

    @pl.when(p == 0)
    def _():
        # Online logsumexp accumulation over the vocab tiles.
        m_prev = m_sc[...]
        m_new = jnp.maximum(m_prev, jnp.max(s, axis=-1, keepdims=True))
        l_sc[...] = (l_sc[...] * jnp.exp(m_prev - m_new)
                     + jnp.sum(jnp.exp(s - m_new), axis=-1, keepdims=True))
        m_sc[...] = m_new

    @pl.when(p == 1)
    def _():
        # max / sum-exp are final after phase 0; recompute logits and write.
        lse = m_sc[...] + jnp.log(l_sc[...])
        o_ref[...] = (s - lse).astype(o_ref.dtype)


# ----------------------------------------------------------------------------
# Sizing helpers
# ----------------------------------------------------------------------------
_TM_CANDIDATES = (256, 128, 64, 32, 16, 8)
_TV_CANDIDATES = (8192, 4096, 2048, 1024, 512, 256, 128)


def _round_up(a, b):
    return ((a + b - 1) // b) * b


def _vmem_budget_bytes():
    try:
        cap = int(pltpu.get_tpu_info().vmem_capacity_bytes)
    except Exception:
        cap = 64 * 1024 * 1024        # conservative (v7x) if the query fails
    return (cap * 3) // 4             # never request the full physical capacity


def _resident_footprint(tm, v, dc, out_bytes, w_bufs):
    x_b = 2 * tm * dc * 2             # double-buffered bf16 activations
    w_b = w_bufs * v * dc * 2         # resident bf16 weight
    b_b = w_bufs * 8 * v * 4          # (1, v) f32 bias, sublane-padded to 8
    o_b = 2 * tm * v * out_bytes      # double-buffered output
    tmp = 2 * tm * v * 4              # f32 logits / shifted intermediates
    return x_b + w_b + b_b + o_b + tmp


def _tiled_footprint(tm, tv, dc, out_bytes):
    x_b = 2 * tm * dc * 2
    w_b = 2 * tv * dc * 2
    b_b = 2 * 8 * tv * 4
    o_b = 2 * tm * tv * out_bytes
    sc = 2 * tm * 128 * 4             # m/l scratch, lane-padded
    tmp = 2 * tm * tv * 4
    return x_b + w_b + b_b + o_b + sc + tmp


def _pick_tm(n, tm_max):
    # Minimize padded rows; among candidates prefer larger tiles.  For large N
    # keep the tile >= 64 so per-step overhead / MXU height stay reasonable.
    floor = 64 if n >= 1024 else 8
    best = None
    for t in _TM_CANDIDATES:
        if t > tm_max or t < floor:
            continue
        pad = (-n) % t
        if best is None or pad < best[0]:
            best = (pad, t)
    if best is not None:
        return best[1]
    for t in _TM_CANDIDATES:
        if t <= tm_max:
            return t
    return 8


# ----------------------------------------------------------------------------
# pallas_call builders
# ----------------------------------------------------------------------------
def _call_resident(x2, w2, b2, *, tm, v_pad, dc, n_pad, out_dtype, vmem_limit,
                   single_buffer_consts):
    const_kwargs = (
        dict(pipeline_mode=pl.Buffered(1)) if single_buffer_consts else {}
    )
    cost = pl.CostEstimate(
        flops=2 * n_pad * dc * v_pad,
        transcendentals=n_pad * v_pad,
        bytes_accessed=(n_pad * dc * 2 + v_pad * dc * 2 + v_pad * 4
                        + n_pad * v_pad * jnp.dtype(out_dtype).itemsize),
    )
    return pl.pallas_call(
        _resident_kernel,
        out_shape=jax.ShapeDtypeStruct((n_pad, v_pad), out_dtype),
        grid_spec=pltpu.PrefetchScalarGridSpec(
            num_scalar_prefetch=0,
            grid=(n_pad // tm,),
            in_specs=[
                pl.BlockSpec((tm, dc), lambda i: (i, 0)),              # x rows
                pl.BlockSpec((v_pad, dc), lambda i: (0, 0), **const_kwargs),  # weight
                pl.BlockSpec((1, v_pad), lambda i: (0, 0), **const_kwargs),   # bias
            ],
            out_specs=pl.BlockSpec((tm, v_pad), lambda i: (i, 0)),
        ),
        compiler_params=pltpu.CompilerParams(
            dimension_semantics=("parallel",),
            vmem_limit_bytes=vmem_limit,
        ),
        cost_estimate=cost,
    )(x2, w2, b2)


def _call_vocab_tiled(x2, w2, b2, *, tm, tv, v_pad, dc, n_pad, out_dtype,
                      vmem_limit):
    n_row = n_pad // tm
    nkv = v_pad // tv
    cost = pl.CostEstimate(
        flops=2 * 2 * n_pad * dc * v_pad,                # logits recomputed in phase 1
        transcendentals=2 * n_pad * v_pad,
        bytes_accessed=(n_pad * dc * 2
                        + 2 * n_row * v_pad * dc * 2     # weight re-read per row tile & phase
                        + 2 * n_row * v_pad * 4
                        + n_pad * v_pad * jnp.dtype(out_dtype).itemsize),
    )
    return pl.pallas_call(
        _vocab_tiled_kernel,
        out_shape=jax.ShapeDtypeStruct((n_pad, v_pad), out_dtype),
        grid_spec=pltpu.PrefetchScalarGridSpec(
            num_scalar_prefetch=0,
            grid=(n_row, 2, nkv),
            in_specs=[
                pl.BlockSpec((tm, dc), lambda i, p, k: (i, 0)),   # x (resident per row tile)
                pl.BlockSpec((tv, dc), lambda i, p, k: (k, 0)),   # weight vocab tile
                pl.BlockSpec((1, tv), lambda i, p, k: (0, k)),    # bias vocab tile
            ],
            # Phase 0 pins block (i, 0): it is never written, never flushed,
            # and is overwritten with real data at phase 1 / k == 0, so the
            # two-phase sweep adds no extra output HBM writeback.
            out_specs=pl.BlockSpec((tm, tv), lambda i, p, k: (i, k * p)),
            scratch_shapes=[pltpu.VMEM((tm, 1), jnp.float32),     # running max
                            pltpu.VMEM((tm, 1), jnp.float32)],    # running sum-exp
        ),
        compiler_params=pltpu.CompilerParams(
            dimension_semantics=("parallel", "arbitrary", "arbitrary"),
            vmem_limit_bytes=vmem_limit,
        ),
        cost_estimate=cost,
    )(x2, w2, b2)


# ----------------------------------------------------------------------------
# Public wrapper (== GeneratorFCOS.forward)
# ----------------------------------------------------------------------------
def generator_fcos(x, weight, bias, *, out_dtype=jnp.float32,
                   force_vocab_tiling=False, tv=None):
    """x: (B, Sc, Dc), weight: (V, Dc), bias: (V,) -> (B, Sc, V) log-probs."""
    B, Sc, Dc = x.shape
    V = weight.shape[0]
    N = B * Sc
    out_bytes = jnp.dtype(out_dtype).itemsize

    budget = _vmem_budget_bytes()
    v128 = _round_up(V, 128)

    # bf16 MXU operands (no-ops if caller pre-casts once); bias/accumulation/
    # softmax math stay f32.
    x2 = x.reshape(N, Dc).astype(jnp.bfloat16)
    w2 = weight.astype(jnp.bfloat16)
    b2 = bias.astype(jnp.float32)

    # ---- choose execution path ------------------------------------------
    tm_cap_resident = None
    if not force_vocab_tiling:
        for t in _TM_CANDIDATES:
            if _resident_footprint(t, v128, Dc, out_bytes, w_bufs=1) <= budget:
                tm_cap_resident = t
                break

    if tm_cap_resident is not None:
        # Path A: resident (V, Dc) weight, single vocab block.
        tm = _pick_tm(N, tm_cap_resident)
        v_pad, tv_used, tiled = v128, None, False
    else:
        # Path B: vocab-tiled online log_softmax (VMEM decoupled from V).
        tm = _pick_tm(N, _TM_CANDIDATES[0])
        if tv is None:
            tv_used = None
            for t in _TV_CANDIDATES:
                if t <= v128 and _tiled_footprint(tm, t, Dc, out_bytes) <= budget:
                    tv_used = t
                    break
            if tv_used is None:
                tv_used = 128
        else:
            tv_used = min(max(128, _round_up(tv, 128)), v128)
        v_pad = _round_up(V, tv_used)
        tiled = True

    n_pad = _round_up(N, tm)

    if n_pad != N:
        x2 = jnp.pad(x2, ((0, n_pad - N), (0, 0)))
    if v_pad != V:
        w2 = jnp.pad(w2, ((0, v_pad - V), (0, 0)))
        # -1e30 bias on padded vocab columns -> exp(.) == 0; they do not
        # perturb the log_softmax and are sliced off below.
        b2 = jnp.pad(b2, ((0, v_pad - V),), constant_values=-1e30)
    b2 = b2.reshape(1, v_pad)

    vmem_limit = int(budget)

    if tiled:
        out2 = _call_vocab_tiled(x2, w2, b2, tm=tm, tv=tv_used, v_pad=v_pad,
                                 dc=Dc, n_pad=n_pad, out_dtype=out_dtype,
                                 vmem_limit=vmem_limit)
    else:
        try:
            out2 = _call_resident(x2, w2, b2, tm=tm, v_pad=v_pad, dc=Dc,
                                  n_pad=n_pad, out_dtype=out_dtype,
                                  vmem_limit=vmem_limit,
                                  single_buffer_consts=True)
        except Exception:
            # Fallback for jax versions that reject pipeline_mode=pl.Buffered(1);
            # identical semantics with default double buffering.
            out2 = _call_resident(x2, w2, b2, tm=tm, v_pad=v_pad, dc=Dc,
                                  n_pad=n_pad, out_dtype=out_dtype,
                                  vmem_limit=vmem_limit,
                                  single_buffer_consts=False)

    return out2[:N, :V].reshape(B, Sc, V)


def _reference(x, weight, bias):
    logits = jnp.einsum("bsd,vd->bsv", x, weight) + bias
    return jax.nn.log_softmax(logits, axis=-1)


if __name__ == "__main__":
    keys = jax.random.split(jax.random.PRNGKey(0), 6)

    # --- Test 1: toy shapes from the module (resident-weight path) ---------
    B, Sc, Dc, V = 2, 8, 32, 128
    x = jax.random.normal(keys[0], (B, Sc, Dc), dtype=jnp.float32)
    weight = jax.random.normal(keys[1], (V, Dc), dtype=jnp.float32) * 0.05
    bias = jax.random.normal(keys[2], (V,), dtype=jnp.float32) * 0.05

    # Pre-cast the weight once outside the per-call path (no per-call HBM cast
    # pass for the resident operand).
    weight_bf16 = weight.astype(jnp.bfloat16)

    out = jax.block_until_ready(generator_fcos(x, weight_bf16, bias))
    ref = _reference(x, weight, bias)
    assert out.shape == (B, Sc, V)
    assert jnp.allclose(out, ref, atol=2e-2, rtol=2e-2), "resident path mismatch"
    assert jnp.allclose(jnp.sum(jnp.exp(out), axis=-1), 1.0, atol=1e-3)

    # --- Test 2: vocab-tiled online-logsumexp path (forced), ragged N and a
    #             vocab size that is not a lane multiple ---------------------
    B2, Sc2, Dc2, V2 = 2, 9, 32, 320
    x_b = jax.random.normal(keys[3], (B2, Sc2, Dc2), dtype=jnp.float32)
    w_b = jax.random.normal(keys[4], (V2, Dc2), dtype=jnp.float32) * 0.05
    bias_b = jax.random.normal(keys[5], (V2,), dtype=jnp.float32) * 0.05

    out_b = jax.block_until_ready(
        generator_fcos(x_b, w_b, bias_b, force_vocab_tiling=True, tv=128))
    ref_b = _reference(x_b, w_b, bias_b)
    assert out_b.shape == (B2, Sc2, V2)
    assert jnp.allclose(out_b, ref_b, atol=2e-2, rtol=2e-2), "tiled path mismatch"
    assert jnp.allclose(jnp.sum(jnp.exp(out_b), axis=-1), 1.0, atol=1e-3)

    print("KERNEL_OK")
</pallas_src>

<mosaic_0001>
module attributes {stable_mosaic.version = 11 : i64} {
  func.func @_resident_kernel(%arg0: i32, %arg1: memref<16x32xbf16, #tpu.memory_space<vmem>>, %arg2: memref<128x32xbf16, #tpu.memory_space<vmem>>, %arg3: memref<1x128xf32, #tpu.memory_space<vmem>>, %arg4: memref<16x128xf32, #tpu.memory_space<vmem>>) attributes {dimension_semantics = [#tpu.dimension_semantics<parallel>], iteration_bounds = array<i64: 1>, scalar_prefetch = 0 : i64, scratch_operands = 0 : i64, tpu.core_type = #tpu.core_type<tc>, window_params = [{transform_indices = @transform_0, window_bounds = array<i64: 16, 32>}, {pipeline_mode = #tpu.pipeline_mode<synchronous>, transform_indices = @transform_1, window_bounds = array<i64: 128, 32>}, {pipeline_mode = #tpu.pipeline_mode<synchronous>, transform_indices = @transform_2, window_bounds = array<i64: 1, 128>}, {transform_indices = @transform_3, window_bounds = array<i64: 16, 128>}]} {
    %c0 = arith.constant 0 : index
    %c0_0 = arith.constant 0 : index
    %0 = vector.load %arg1[%c0, %c0_0] : memref<16x32xbf16, #tpu.memory_space<vmem>>, vector<16x32xbf16>
    %c0_1 = arith.constant 0 : index
    %c0_2 = arith.constant 0 : index
    %1 = vector.load %arg2[%c0_1, %c0_2] : memref<128x32xbf16, #tpu.memory_space<vmem>>, vector<128x32xbf16>
    %cst = arith.constant dense<0.000000e+00> : vector<16x128xf32>
    %2 = tpu.matmul %0, %1, %cst {dimension_numbers = #tpu.dot_dimension_numbers<[1], [1], [0], [0], [0, 0, 1, 0], [], []>} : vector<16x32xbf16>, vector<128x32xbf16>, vector<16x128xf32> -> vector<16x128xf32>
    %c0_3 = arith.constant 0 : index
    %c0_4 = arith.constant 0 : index
    %3 = vector.load %arg3[%c0_3, %c0_4] : memref<1x128xf32, #tpu.memory_space<vmem>>, vector<1x128xf32>
    %4 = vector.broadcast %3 : vector<1x128xf32> to vector<16x128xf32>
    %5 = arith.addf %2, %4 : vector<16x128xf32>
    %cst_5 = arith.constant dense<0xFF800000> : vector<16xf32>
    %6 = vector.multi_reduction <maximumf>, %5, %cst_5 [1] : vector<16x128xf32> to vector<16xf32>
    %7 = vector.shape_cast %6 : vector<16xf32> to vector<16x1xf32>
    %8 = vector.broadcast %7 : vector<16x1xf32> to vector<16x128xf32>
    %9 = arith.subf %5, %8 : vector<16x128xf32>
    %10 = math.exp %9 : vector<16x128xf32>
    %cst_6 = arith.constant dense<0.000000e+00> : vector<16xf32>
    %11 = vector.multi_reduction <add>, %10, %cst_6 [1] : vector<16x128xf32> to vector<16xf32>
    %12 = vector.shape_cast %11 : vector<16xf32> to vector<16x1xf32>
    %13 = math.log %12 : vector<16x1xf32>
    %14 = vector.broadcast %13 : vector<16x1xf32> to vector<16x128xf32>
    %15 = arith.subf %9, %14 : vector<16x128xf32>
    %c0_7 = arith.constant 0 : index
    %c0_8 = arith.constant 0 : index
    %16 = vector.load %arg4[%c0_7, %c0_8] : memref<16x128xf32, #tpu.memory_space<vmem>>, vector<16x128xf32>
    tpu.vector_store %arg4[%c0_7, %c0_8], %15 {strides = array<i32>} : memref<16x128xf32, #tpu.memory_space<vmem>>, vector<16x128xf32>,
    return
  }
  func.func @transform_0(%arg0: i32) -> (i32, i32) {
    %c0_i32 = arith.constant 0 : i32
    %c0_i32_0 = arith.constant 0 : i32
    return %arg0, %c0_i32 : i32, i32
  }
  func.func @transform_1(%arg0: i32) -> (i32, i32) {
    %c0_i32 = arith.constant 0 : i32
    %c0_i32_0 = arith.constant 0 : i32
    %c0_i32_1 = arith.constant 0 : i32
    return %c0_i32, %c0_i32_0 : i32, i32
  }
  func.func @transform_2(%arg0: i32) -> (i32, i32) {
    %c0_i32 = arith.constant 0 : i32
    %c0_i32_0 = arith.constant 0 : i32
    %c0_i32_1 = arith.constant 0 : i32
    return %c0_i32, %c0_i32_0 : i32, i32
  }
  func.func @transform_3(%arg0: i32) -> (i32, i32) {
    %c0_i32 = arith.constant 0 : i32
    %c0_i32_0 = arith.constant 0 : i32
    return %arg0, %c0_i32 : i32, i32
  }
}

module attributes {stable_mosaic.version = 11 : i64} {
  func.func @_resident_kernel(%arg0: i32, %arg1: memref<16x32xbf16, #tpu.memory_space<vmem>>, %arg2: memref<128x32xbf16, #tpu.memory_space<vmem>>, %arg3: memref<1x128xf32, #tpu.memory_space<vmem>>, %arg4: memref<16x128xf32, #tpu.memory_space<vmem>>) attributes {dimension_semantics = [#tpu.dimension_semantics<parallel>], iteration_bounds = array<i64: 1>, scalar_prefetch = 0 : i64, scratch_operands = 0 : i64, tpu.core_type = #tpu.core_type<tc>, window_params = [{transform_indices = @transform_0, window_bounds = array<i64: 16, 32>}, {pipeline_mode = #tpu.pipeline_mode<synchronous>, transform_indices = @transform_1, window_bounds = array<i64: 128, 32>}, {pipeline_mode = #tpu.pipeline_mode<synchronous>, transform_indices = @transform_2, window_bounds = array<i64: 1, 128>}, {transform_indices = @transform_3, window_bounds = array<i64: 16, 128>}]} {
    %c0 = arith.constant 0 : index
    %c0_0 = arith.constant 0 : index
    %0 = vector.load %arg1[%c0, %c0_0] : memref<16x32xbf16, #tpu.memory_space<vmem>>, vector<16x32xbf16>
    %c0_1 = arith.constant 0 : index
    %c0_2 = arith.constant 0 : index
    %1 = vector.load %arg2[%c0_1, %c0_2] : memref<128x32xbf16, #tpu.memory_space<vmem>>, vector<128x32xbf16>
    %cst = arith.constant dense<0.000000e+00> : vector<16x128xf32>
    %2 = tpu.matmul %0, %1, %cst {dimension_numbers = #tpu.dot_dimension_numbers<[1], [1], [0], [0], [0, 0, 1, 0], [], []>} : vector<16x32xbf16>, vector<128x32xbf16>, vector<16x128xf32> -> vector<16x128xf32>
    %c0_3 = arith.constant 0 : index
    %c0_4 = arith.constant 0 : index
    %3 = vector.load %arg3[%c0_3, %c0_4] : memref<1x128xf32, #tpu.memory_space<vmem>>, vector<1x128xf32>
    %4 = vector.broadcast %3 : vector<1x128xf32> to vector<16x128xf32>
    %5 = arith.addf %2, %4 : vector<16x128xf32>
    %cst_5 = arith.constant dense<0xFF800000> : vector<16xf32>
    %6 = vector.multi_reduction <maximumf>, %5, %cst_5 [1] : vector<16x128xf32> to vector<16xf32>
    %7 = vector.shape_cast %6 : vector<16xf32> to vector<16x1xf32>
    %8 = vector.broadcast %7 : vector<16x1xf32> to vector<16x128xf32>
    %9 = arith.subf %5, %8 : vector<16x128xf32>
    %10 = math.exp %9 : vector<16x128xf32>
    %cst_6 = arith.constant dense<0.000000e+00> : vector<16xf32>
    %11 = vector.multi_reduction <add>, %10, %cst_6 [1] : vector<16x128xf32> to vector<16xf32>
    %12 = vector.shape_cast %11 : vector<16xf32> to vector<16x1xf32>
    %13 = math.log %12 : vector<16x1xf32>
    %14 = vector.broadcast %13 : vector<16x1xf32> to vector<16x128xf32>
    %15 = arith.subf %9, %14 : vector<16x128xf32>
    %c0_7 = arith.constant 0 : index
    %c0_8 = arith.constant 0 : index
    %16 = vector.load %arg4[%c0_7, %c0_8] : memref<16x128xf32, #tpu.memory_space<vmem>>, vector<16x128xf32>
    tpu.vector_store %arg4[%c0_7, %c0_8], %15 {strides = array<i32>} : memref<16x128xf32, #tpu.memory_space<vmem>>, vector<16x128xf32>,
    return
  }
  func.func @transform_0(%arg0: i32) -> (i32, i32) {
    %c0_i32 = arith.constant 0 : i32
    %c0_i32_0 = arith.constant 0 : i32
    return %arg0, %c0_i32 : i32, i32
  }
  func.func @transform_1(%arg0: i32) -> (i32, i32) {
    %c0_i32 = arith.constant 0 : i32
    %c0_i32_0 = arith.constant 0 : i32
    %c0_i32_1 = arith.constant 0 : i32
    return %c0_i32, %c0_i32_0 : i32, i32
  }
  func.func @transform_2(%arg0: i32) -> (i32, i32) {
    %c0_i32 = arith.constant 0 : i32
    %c0_i32_0 = arith.constant 0 : i32
    %c0_i32_1 = arith.constant 0 : i32
    return %c0_i32, %c0_i32_0 : i32, i32
  }
  func.func @transform_3(%arg0: i32) -> (i32, i32) {
    %c0_i32 = arith.constant 0 : i32
    %c0_i32_0 = arith.constant 0 : i32
    return %arg0, %c0_i32 : i32, i32
  }
}

</mosaic_0001>

<llo_original>
// kernel: tpu_custom_call.1
$region0: #{tpu_custom_call.1}
  #allocation0 [shape = 'u32[]', space=smem, size = 0x4, offset = 0x4, fixed_abs, tag = 'smem constant byte address 0x4 - core index']
  #allocation1 [shape = 'u32[72,128]{1,0:T(1,128)}', space=vmem, size = 0x9000, scoped, tag = 'internal scratch']
  %s0 = inlined_call_operand.vmem [shape: bf16[16,32], index: 0, kind: input, shape index: {}]
  %s1 = inlined_call_operand.vmem [shape: bf16[128,32], index: 1, kind: input, shape index: {}]
  %s2 = inlined_call_operand.vmem [shape: f32[1,128], index: 2, kind: input, shape index: {}]
  %s3 = inlined_call_operand.hbm [shape: f32[16,128], index: 3, kind: output, shape index: {}]
  %s4 = sld [smem:[#allocation0]]
  $region22: #{tpu_custom_call.1} parent=0
    _
  %s6 = ssub.s32 1, %s4
  %s7 = scalar_select 0, %s6, %s4
  $region1: #{tpu_custom_call.1} parent=0
    #allocation2 [shape = 'u8[8192]{0}', space=vmem, size = 0x2000, scoped, tag = 'output window, operand 0, single buffered']
    #allocation3 [shape = 's32[1]{0}', space=sflag, size = 0x4, scoped, tag = 'scoped memory for tpu_custom_call.1']
    %8 = vsyncpa [#allocation3], 0
    // Predicated region
    $region2: #{tpu_custom_call.1} parent=1 // pred_check
      _
    $region3: #{tpu_custom_call.1} parent=1 // pred_check_branch
      %10 = sbr.rel (0) target = $region5
    $region4: #{tpu_custom_call.1} parent=1 // pred_region
      _
    $region5: #{tpu_custom_call.1} parent=1 // pred_fallthru
      _
    // Predicated region
    $region6: #{tpu_custom_call.1} parent=1 // pred_check
      _
    $region7: #{tpu_custom_call.1} parent=1 // pred_check_branch
      %12 = sbr.rel (0) target = $region9
    $region8: #{tpu_custom_call.1} parent=1 // pred_region
      _
    $region9: #{tpu_custom_call.1} parent=1 // pred_fallthru
      _
    // Predicated region
    $region10: #{tpu_custom_call.1} parent=1 // pred_check
      _
    $region11: #{tpu_custom_call.1} parent=1 // pred_check_branch
      %14 = sbr.rel (0) target = $region13
    $region12: #{tpu_custom_call.1} parent=1 // pred_region
      _
    $region13: #{tpu_custom_call.1} parent=1 // pred_fallthru
      _
    %v15 = vld [vmem:[%s0] sm:$0xf]
    %v16 = vld [vmem:[%s0 + $0x4] sm:$0xf]
    %v17 = vld [vmem:[%s1] sm:$0xf]
    %v18 = vld [vmem:[%s1 + $0x4] sm:$0xf]
    %v19 = vld [vmem:[%s1 + $0x8] sm:$0xf]
    %v20 = vld [vmem:[%s1 + $0xc] sm:$0xf]
    %v21 = vld [vmem:[%s1 + $0x10] sm:$0xf]
    %v22 = vld [vmem:[%s1 + $0x14] sm:$0xf]
    %v23 = vld [vmem:[%s1 + $0x18] sm:$0xf]
    %v24 = vld [vmem:[%s1 + $0x1c] sm:$0xf]
    %v25 = vld [vmem:[%s1 + $0x20] sm:$0xf]
    %v26 = vld [vmem:[%s1 + $0x24] sm:$0xf]
    %v27 = vld [vmem:[%s1 + $0x28] sm:$0xf]
    %v28 = vld [vmem:[%s1 + $0x2c] sm:$0xf]
    %v29 = vld [vmem:[%s1 + $0x30] sm:$0xf]
    %v30 = vld [vmem:[%s1 + $0x34] sm:$0xf]
    %v31 = vld [vmem:[%s1 + $0x38] sm:$0xf]
    %v32 = vld [vmem:[%s1 + $0x3c] sm:$0xf]
    %v33 = vld [vmem:[%s2] sm:$0x1]
    %v35 = vperm.slane %v33, 0
    %v39 = vunpack.c.l.b16 %v15
    %v40 = vunpack.c.l.b16 %v16
    %v41 = vpack.c.b16 %v40, %v39
    %v58 = vunpack.c.l.b16 %v17
    %v59 = vunpack.c.l.b16 %v18
    %v60 = vunpack.c.l.b16 %v19
    %v61 = vunpack.c.l.b16 %v20
    %v62 = vunpack.c.l.b16 %v21
    %v63 = vunpack.c.l.b16 %v22
    %v64 = vunpack.c.l.b16 %v23
    %v65 = vunpack.c.l.b16 %v24
    %v66 = vunpack.c.l.b16 %v25
    %v67 = vunpack.c.l.b16 %v26
    %v68 = vunpack.c.l.b16 %v27
    %v69 = vunpack.c.l.b16 %v28
    %v70 = vunpack.c.l.b16 %v29
    %v71 = vunpack.c.l.b16 %v30
    %v72 = vunpack.c.l.b16 %v31
    %v73 = vunpack.c.l.b16 %v32
    %v74 = vpack.c.b16 %v59, %v58
    %v75 = vpack.c.b16 %v61, %v60
    %v76 = vpack.c.b16 %v63, %v62
    %v77 = vpack.c.b16 %v65, %v64
    %v78 = vpack.c.b16 %v67, %v66
    %v79 = vpack.c.b16 %v69, %v68
    %v80 = vpack.c.b16 %v71, %v70
    %v81 = vpack.c.b16 %v73, %v72
    %vm82 = vcmask 261120
    %v84 = vsel %vm82, %v41, 0
    %v87 = vsel %vm82, %v74, 0
    %v90 = vsel %vm82, %v75, 0
    %v93 = vsel %vm82, %v76, 0
    %v96 = vsel %vm82, %v77, 0
    %v99 = vsel %vm82, %v78, 0
    %v102 = vsel %vm82, %v79, 0
    %v105 = vsel %vm82, %v80, 0
    %v108 = vsel %vm82, %v81, 0
    %110 = vmatpush.bf16.xpose.msra.mxu0 %v108
    %111 = vmatpush.bf16.xpose.msra.mxu0 %v105
    %112 = vmatpush.bf16.xpose.msra.mxu0 %v102
    %113 = vmatpush.bf16.xpose.msra.mxu0 %v99
    %114 = vmatpush.bf16.xpose.msra.mxu0 %v96
    %115 = vmatpush.bf16.xpose.msra.mxu0 %v93
    %116 = vmatpush.bf16.xpose.msra.mxu0 %v90
    %117 = vmatpush.bf16.xpose.msra.mxu0 %v87
    %118 = vmatmul.bf16.gmra.mxu0 %v84
    %v119 = vpop.f32.mrf.mxu0
    %v120 = vadd.f32 %v35, %v119
    %v121 = vpop.f32.mrf.mxu0
    %v122 = vadd.f32 %v35, %v121
    %123 = vdwg.mxu0
    %124 = vmax.xlane.f32.xlu0 %v120
    %v125 = vpop.xlane.xlu0 %124
    %126 = vmax.xlane.f32.xlu0 %v122
    %v127 = vpop.xlane.xlu0 %126
    %v128 = vsub.f32 %v120, %v125
    %v129 = vsub.f32 %v122, %v127
    %v130 = vmul.f32 %v128, 1.442695
    %v131 = vpow.pop %v130
    %v132 = vmul.f32 %v129, 1.442695
    %v133 = vpow.pop %v132
    %134 = vadd.xlane.f32.xlu0 %v131
    %v135 = vpop.xlane.xlu0 %134
    %136 = vadd.xlane.f32.xlu0 %v133
    %v137 = vpop.xlane.xlu0 %136
    %v138 = vlog2.pop %v135
    %v139 = vmul.f32 %v138, 0.6931472
    %v140 = vlog2.pop %v137
    %v141 = vmul.f32 %v140, 0.6931472
    %v142 = vsub.f32 %v128, %v139
    %v143 = vsub.f32 %v129, %v141
    %144 = vst [vmem:[#allocation2] sm:$0xff] %v142
    %145 = vst [vmem:[#allocation2 + $0x8] sm:$0xff] %v143
    // Predicated region
    $region14: #{tpu_custom_call.1} parent=1 // pred_check
      _
    $region15: #{tpu_custom_call.1} parent=1 // pred_check_branch
      %147 = sbr.rel (0) target = $region17
    $region16: #{tpu_custom_call.1} parent=1 // pred_region
      %149 = vsyncadd [#allocation3], 0
      %s150 = sshll.u32 [#allocation2], 4
      %s151 = int_to_ptr.vmem [resolvable:$true] %s150
      %s152 = sshll.u32 %s3, 4
      %s153 = int_to_ptr.hbm [resolvable:$true] %s152
      %158 = dma.vmem_to_hbm [thread:$0]  %s151, 256, %s153, [#allocation3], 128, 128, 8
    $region17: #{tpu_custom_call.1} parent=1 // pred_fallthru
      _
    // Predicated region
    $region18: #{tpu_custom_call.1} parent=1 // pred_check
      _
    $region19: #{tpu_custom_call.1} parent=1 // pred_check_branch
      %160 = sbr.rel (0) target = $region21
    $region20: #{tpu_custom_call.1} parent=1 // pred_region
      %162 = dma.done [#allocation3], 256
    $region21: #{tpu_custom_call.1} parent=1 // pred_fallthru
      _
    %163 = vsyncpa [#allocation3], 1

// kernel: tpu_custom_call.1
$region0: #{tpu_custom_call.1}
  #allocation0 [shape = 'u32[]', space=smem, size = 0x4, offset = 0x4, fixed_abs, tag = 'smem constant byte address 0x4 - core index']
  #allocation1 [shape = 'u32[72,128]{1,0:T(1,128)}', space=vmem, size = 0x9000, scoped, tag = 'internal scratch']
  %s0 = inlined_call_operand.vmem [shape: bf16[16,32], index: 0, kind: input, shape index: {}]
  %s1 = inlined_call_operand.vmem [shape: bf16[128,32], index: 1, kind: input, shape index: {}]
  %s2 = inlined_call_operand.vmem [shape: f32[1,128], index: 2, kind: input, shape index: {}]
  %s3 = inlined_call_operand.hbm [shape: f32[16,128], index: 3, kind: output, shape index: {}]
  %s4 = sld [smem:[#allocation0]]
  $region22: #{tpu_custom_call.1} parent=0
    _
  %s6 = ssub.s32 1, %s4
  %s7 = scalar_select 0, %s6, %s4
  $region1: #{tpu_custom_call.1} parent=0
    #allocation2 [shape = 'u8[8192]{0}', space=vmem, size = 0x2000, scoped, tag = 'output window, operand 0, single buffered']
    #allocation3 [shape = 's32[1]{0}', space=sflag, size = 0x4, scoped, tag = 'scoped memory for tpu_custom_call.1']
    %8 = vsyncpa [#allocation3], 0
    // Predicated region
    $region2: #{tpu_custom_call.1} parent=1 // pred_check
      _
    $region3: #{tpu_custom_call.1} parent=1 // pred_check_branch
      %10 = sbr.rel (0) target = $region5
    $region4: #{tpu_custom_call.1} parent=1 // pred_region
      _
    $region5: #{tpu_custom_call.1} parent=1 // pred_fallthru
      _
    // Predicated region
    $region6: #{tpu_custom_call.1} parent=1 // pred_check
      _
    $region7: #{tpu_custom_call.1} parent=1 // pred_check_branch
      %12 = sbr.rel (0) target = $region9
    $region8: #{tpu_custom_call.1} parent=1 // pred_region
      _
    $region9: #{tpu_custom_call.1} parent=1 // pred_fallthru
      _
    // Predicated region
    $region10: #{tpu_custom_call.1} parent=1 // pred_check
      _
    $region11: #{tpu_custom_call.1} parent=1 // pred_check_branch
      %14 = sbr.rel (0) target = $region13
    $region12: #{tpu_custom_call.1} parent=1 // pred_region
      _
    $region13: #{tpu_custom_call.1} parent=1 // pred_fallthru
      _
    %v15 = vld [vmem:[%s0] sm:$0xf]
    %v16 = vld [vmem:[%s0 + $0x4] sm:$0xf]
    %v17 = vld [vmem:[%s1] sm:$0xf]
    %v18 = vld [vmem:[%s1 + $0x4] sm:$0xf]
    %v19 = vld [vmem:[%s1 + $0x8] sm:$0xf]
    %v20 = vld [vmem:[%s1 + $0xc] sm:$0xf]
    %v21 = vld [vmem:[%s1 + $0x10] sm:$0xf]
    %v22 = vld [vmem:[%s1 + $0x14] sm:$0xf]
    %v23 = vld [vmem:[%s1 + $0x18] sm:$0xf]
    %v24 = vld [vmem:[%s1 + $0x1c] sm:$0xf]
    %v25 = vld [vmem:[%s1 + $0x20] sm:$0xf]
    %v26 = vld [vmem:[%s1 + $0x24] sm:$0xf]
    %v27 = vld [vmem:[%s1 + $0x28] sm:$0xf]
    %v28 = vld [vmem:[%s1 + $0x2c] sm:$0xf]
    %v29 = vld [vmem:[%s1 + $0x30] sm:$0xf]
    %v30 = vld [vmem:[%s1 + $0x34] sm:$0xf]
    %v31 = vld [vmem:[%s1 + $0x38] sm:$0xf]
    %v32 = vld [vmem:[%s1 + $0x3c] sm:$0xf]
    %v33 = vld [vmem:[%s2] sm:$0x1]
    %v35 = vperm.slane %v33, 0
    %v39 = vunpack.c.l.b16 %v15
    %v40 = vunpack.c.l.b16 %v16
    %v41 = vpack.c.b16 %v40, %v39
    %v58 = vunpack.c.l.b16 %v17
    %v59 = vunpack.c.l.b16 %v18
    %v60 = vunpack.c.l.b16 %v19
    %v61 = vunpack.c.l.b16 %v20
    %v62 = vunpack.c.l.b16 %v21
    %v63 = vunpack.c.l.b16 %v22
    %v64 = vunpack.c.l.b16 %v23
    %v65 = vunpack.c.l.b16 %v24
    %v66 = vunpack.c.l.b16 %v25
    %v67 = vunpack.c.l.b16 %v26
    %v68 = vunpack.c.l.b16 %v27
    %v69 = vunpack.c.l.b16 %v28
    %v70 = vunpack.c.l.b16 %v29
    %v71 = vunpack.c.l.b16 %v30
    %v72 = vunpack.c.l.b16 %v31
    %v73 = vunpack.c.l.b16 %v32
    %v74 = vpack.c.b16 %v59, %v58
    %v75 = vpack.c.b16 %v61, %v60
    %v76 = vpack.c.b16 %v63, %v62
    %v77 = vpack.c.b16 %v65, %v64
    %v78 = vpack.c.b16 %v67, %v66
    %v79 = vpack.c.b16 %v69, %v68
    %v80 = vpack.c.b16 %v71, %v70
    %v81 = vpack.c.b16 %v73, %v72
    %vm82 = vcmask 261120
    %v84 = vsel %vm82, %v41, 0
    %v87 = vsel %vm82, %v74, 0
    %v90 = vsel %vm82, %v75, 0
    %v93 = vsel %vm82, %v76, 0
    %v96 = vsel %vm82, %v77, 0
    %v99 = vsel %vm82, %v78, 0
    %v102 = vsel %vm82, %v79, 0
    %v105 = vsel %vm82, %v80, 0
    %v108 = vsel %vm82, %v81, 0
    %110 = vmatpush.bf16.xpose.msra.mxu0 %v108
    %111 = vmatpush.bf16.xpose.msra.mxu0 %v105
    %112 = vmatpush.bf16.xpose.msra.mxu0 %v102
    %113 = vmatpush.bf16.xpose.msra.mxu0 %v99
    %114 = vmatpush.bf16.xpose.msra.mxu0 %v96
    %115 = vmatpush.bf16.xpose.msra.mxu0 %v93
    %116 = vmatpush.bf16.xpose.msra.mxu0 %v90
    %117 = vmatpush.bf16.xpose.msra.mxu0 %v87
    %118 = vmatmul.bf16.gmra.mxu0 %v84
    %v119 = vpop.f32.mrf.mxu0
    %v120 = vadd.f32 %v35, %v119
    %v121 = vpop.f32.mrf.mxu0
    %v122 = vadd.f32 %v35, %v121
    %123 = vdwg.mxu0
    %124 = vmax.xlane.f32.xlu0 %v120
    %v125 = vpop.xlane.xlu0 %124
    %126 = vmax.xlane.f32.xlu0 %v122
    %v127 = vpop.xlane.xlu0 %126
    %v128 = vsub.f32 %v120, %v125
    %v129 = vsub.f32 %v122, %v127
    %v130 = vmul.f32 %v128, 1.442695
    %v131 = vpow.pop %v130
    %v132 = vmul.f32 %v129, 1.442695
    %v133 = vpow.pop %v132
    %134 = vadd.xlane.f32.xlu0 %v131
    %v135 = vpop.xlane.xlu0 %134
    %136 = vadd.xlane.f32.xlu0 %v133
    %v137 = vpop.xlane.xlu0 %136
    %v138 = vlog2.pop %v135
    %v139 = vmul.f32 %v138, 0.6931472
    %v140 = vlog2.pop %v137
    %v141 = vmul.f32 %v140, 0.6931472
    %v142 = vsub.f32 %v128, %v139
    %v143 = vsub.f32 %v129, %v141
    %144 = vst [vmem:[#allocation2] sm:$0xff] %v142
    %145 = vst [vmem:[#allocation2 + $0x8] sm:$0xff] %v143
    // Predicated region
    $region14: #{tpu_custom_call.1} parent=1 // pred_check
      _
    $region15: #{tpu_custom_call.1} parent=1 // pred_check_branch
      %147 = sbr.rel (0) target = $region17
    $region16: #{tpu_custom_call.1} parent=1 // pred_region
      %149 = vsyncadd [#allocation3], 0
      %s150 = sshll.u32 [#allocation2], 4
      %s151 = int_to_ptr.vmem [resolvable:$true] %s150
      %s152 = sshll.u32 %s3, 4
      %s153 = int_to_ptr.hbm [resolvable:$true] %s152
      %158 = dma.vmem_to_hbm [thread:$0]  %s151, 256, %s153, [#allocation3], 128, 128, 8
    $region17: #{tpu_custom_call.1} parent=1 // pred_fallthru
      _
    // Predicated region
    $region18: #{tpu_custom_call.1} parent=1 // pred_check
      _
    $region19: #{tpu_custom_call.1} parent=1 // pred_check_branch
      %160 = sbr.rel (0) target = $region21
    $region20: #{tpu_custom_call.1} parent=1 // pred_region
      %162 = dma.done [#allocation3], 256
    $region21: #{tpu_custom_call.1} parent=1 // pred_fallthru
      _
    %163 = vsyncpa [#allocation3], 1

</llo_original>
